<compile_context>
chip_gen: v6e
topology: v6e:2x2x1
jax: 0.10.0
libtpu: 0.0.40
codegen_flags: <defaults>
</compile_context>

<pallas_src>
import jax
import jax.numpy as jnp
from jax.experimental import pallas as pl
from jax.experimental.pallas import tpu as pltpu

_LANE = 128
_MAX_BATCH_TILE = 512  # rows per grid step for large batches (multiple of 8)


def policy_mean_kernel(x_ref, w1_ref, b1_ref, w2_ref, b2_ref, w3_ref, b3_ref,
                       mean_ref):
    x = x_ref[...]
    h1 = jnp.tanh(
        jnp.dot(x, w1_ref[...], preferred_element_type=jnp.float32) + b1_ref[...]
    )
    h2 = jnp.tanh(
        jnp.dot(h1, w2_ref[...], preferred_element_type=jnp.float32) + b2_ref[...]
    )
    mean_ref[...] = (
        jnp.dot(h2, w3_ref[...], preferred_element_type=jnp.float32) + b3_ref[...]
    )


def prepare_params(params):
    """One-time parameter prep (hoisted out of the per-call path).

    Transposes PyTorch-layout (out, in) weights to (in, out), reshapes biases /
    log_std to (1, out), and zero-pads the action head's out dim to a 128-lane
    multiple so the kernel's output store is lane-dense (unmasked vst)."""
    A = params["w3"].shape[0]
    A_pad = ((A + _LANE - 1) // _LANE) * _LANE
    pad = A_pad - A
    return {
        "w1t": jnp.asarray(params["w1"], jnp.float32).T,
        "b1": jnp.asarray(params["b1"], jnp.float32).reshape(1, -1),
        "w2t": jnp.asarray(params["w2"], jnp.float32).T,
        "b2": jnp.asarray(params["b2"], jnp.float32).reshape(1, -1),
        "w3t": jnp.pad(jnp.asarray(params["w3"], jnp.float32).T, ((0, 0), (0, pad))),
        "b3": jnp.pad(jnp.asarray(params["b3"], jnp.float32).reshape(1, -1),
                      ((0, 0), (0, pad))),
        "log_std": jnp.asarray(params["log_std"], jnp.float32).reshape(1, -1),
    }


@jax.jit
def policy_forward(x, prep):
    """x: [B, num_inputs] f32, prep: output of prepare_params.

    Returns (action_mean, action_log_std, action_std), each [B, num_outputs]."""
    B, num_inputs = x.shape
    hidden = prep["w1t"].shape[1]
    A = prep["log_std"].shape[1]
    A_pad = prep["w3t"].shape[1]

    # Batch tile: whole batch in one step when small; 512-row (multiple of 8)
    # pipelined tiles otherwise (weights stay resident across steps).
    TB = B if B <= _MAX_BATCH_TILE else _MAX_BATCH_TILE
    grid = (pl.cdiv(B, TB),)

    const = lambda i: (0, 0)   # same block every step -> no re-fetch (resident)
    batch = lambda i: (i, 0)   # walk the batch axis

    flops = 2 * B * (num_inputs * hidden + hidden * hidden + hidden * A_pad)
    bytes_accessed = 4 * (B * num_inputs
                          + num_inputs * hidden + hidden
                          + hidden * hidden + hidden
                          + hidden * A_pad + A_pad
                          + B * A_pad)

    mean_pad = pl.pallas_call(
        policy_mean_kernel,
        out_shape=jax.ShapeDtypeStruct((B, A_pad), jnp.float32),
        grid=grid,
        in_specs=[
            pl.BlockSpec((TB, num_inputs), batch),     # x
            pl.BlockSpec((num_inputs, hidden), const),  # w1t
            pl.BlockSpec((1, hidden), const),           # b1
            pl.BlockSpec((hidden, hidden), const),      # w2t
            pl.BlockSpec((1, hidden), const),           # b2
            pl.BlockSpec((hidden, A_pad), const),       # w3t (lane-padded)
            pl.BlockSpec((1, A_pad), const),            # b3  (lane-padded)
        ],
        out_specs=pl.BlockSpec((TB, A_pad), batch),
        compiler_params=pltpu.CompilerParams(
            dimension_semantics=("parallel",)),
        cost_estimate=pl.CostEstimate(
            flops=flops,
            transcendentals=2 * B * hidden,   # two tanh layers
            bytes_accessed=bytes_accessed),
    )(x, prep["w1t"], prep["b1"], prep["w2t"], prep["b2"], prep["w3t"], prep["b3"])

    action_mean = mean_pad[:, :A]
    # Batch-independent head: expand/exp done on A values in the wrapper,
    # not per-row inside the kernel.
    action_log_std = jnp.broadcast_to(prep["log_std"], (B, A))
    action_std = jnp.broadcast_to(jnp.exp(prep["log_std"]), (B, A))
    return action_mean, action_log_std, action_std


def init_params(key, num_inputs, num_outputs, hidden):
    """Deterministic synthetic init mirroring nn.Linear shapes + the module's
    post-init scaling (action_mean weight *= 0.1, bias *= 0.0, log_std = 0)."""
    k1, k2, k3, k4, k5, k6 = jax.random.split(key, 6)

    def linear_init(kw, kb, fan_in, fan_out):
        bound = 1.0 / jnp.sqrt(fan_in)
        w = jax.random.uniform(kw, (fan_out, fan_in), jnp.float32, -bound, bound)
        b = jax.random.uniform(kb, (fan_out,), jnp.float32, -bound, bound)
        return w, b

    w1, b1 = linear_init(k1, k2, num_inputs, hidden)
    w2, b2 = linear_init(k3, k4, hidden, hidden)
    w3, b3 = linear_init(k5, k6, hidden, num_outputs)
    w3 = w3 * 0.1
    b3 = b3 * 0.0
    log_std = jnp.zeros((1, num_outputs), jnp.float32)
    return {"w1": w1, "b1": b1, "w2": w2, "b2": b2,
            "w3": w3, "b3": b3, "log_std": log_std}


def reference_forward(x, p):
    h1 = jnp.tanh(x @ p["w1"].T + p["b1"])
    h2 = jnp.tanh(h1 @ p["w2"].T + p["b2"])
    mean = h2 @ p["w3"].T + p["b3"]
    log_std = jnp.broadcast_to(p["log_std"], mean.shape)
    return mean, log_std, jnp.exp(log_std)


if __name__ == "__main__":
    key = jax.random.PRNGKey(0)
    B, num_inputs, num_outputs, hidden = 8, 16, 4, 32

    k_params, k_x = jax.random.split(key)
    params = init_params(k_params, num_inputs, num_outputs, hidden)
    x = jax.random.normal(k_x, (B, num_inputs), jnp.float32)

    prep = prepare_params(params)  # one-time (per-model) prep, NOT per call
    mean, log_std, std = jax.block_until_ready(policy_forward(x, prep))
    ref_mean, ref_log_std, ref_std = reference_forward(x, params)

    assert mean.shape == (B, num_outputs)
    assert log_std.shape == (B, num_outputs)
    assert std.shape == (B, num_outputs)
    assert jnp.allclose(mean, ref_mean, atol=1e-5, rtol=1e-5)
    assert jnp.allclose(log_std, ref_log_std, atol=1e-6)
    assert jnp.allclose(std, ref_std, atol=1e-5, rtol=1e-5)

    print("KERNEL_OK")
</pallas_src>

<mosaic_0001>
module attributes {stable_mosaic.version = 11 : i64} {
  func.func @policy_mean_kernel(%arg0: i32, %arg1: memref<8x16xf32, #tpu.memory_space<vmem>>, %arg2: memref<16x32xf32, #tpu.memory_space<vmem>>, %arg3: memref<1x32xf32, #tpu.memory_space<vmem>>, %arg4: memref<32x32xf32, #tpu.memory_space<vmem>>, %arg5: memref<1x32xf32, #tpu.memory_space<vmem>>, %arg6: memref<32x128xf32, #tpu.memory_space<vmem>>, %arg7: memref<1x128xf32, #tpu.memory_space<vmem>>, %arg8: memref<8x128xf32, #tpu.memory_space<vmem>>) attributes {dimension_semantics = [#tpu.dimension_semantics<parallel>], iteration_bounds = array<i64: 1>, scalar_prefetch = 0 : i64, scratch_operands = 0 : i64, tpu.core_type = #tpu.core_type<tc>, window_params = [{transform_indices = @transform_0, window_bounds = array<i64: 8, 16>}, {pipeline_mode = #tpu.pipeline_mode<synchronous>, transform_indices = @transform_1, window_bounds = array<i64: 16, 32>}, {pipeline_mode = #tpu.pipeline_mode<synchronous>, transform_indices = @transform_2, window_bounds = array<i64: 1, 32>}, {pipeline_mode = #tpu.pipeline_mode<synchronous>, transform_indices = @transform_3, window_bounds = array<i64: 32, 32>}, {pipeline_mode = #tpu.pipeline_mode<synchronous>, transform_indices = @transform_4, window_bounds = array<i64: 1, 32>}, {pipeline_mode = #tpu.pipeline_mode<synchronous>, transform_indices = @transform_5, window_bounds = array<i64: 32, 128>}, {pipeline_mode = #tpu.pipeline_mode<synchronous>, transform_indices = @transform_6, window_bounds = array<i64: 1, 128>}, {transform_indices = @transform_7, window_bounds = array<i64: 8, 128>}]} {
    %c0 = arith.constant 0 : index
    %c0_0 = arith.constant 0 : index
    %0 = vector.load %arg1[%c0, %c0_0] : memref<8x16xf32, #tpu.memory_space<vmem>>, vector<8x16xf32>
    %c0_1 = arith.constant 0 : index
    %c0_2 = arith.constant 0 : index
    %1 = vector.load %arg2[%c0_1, %c0_2] : memref<16x32xf32, #tpu.memory_space<vmem>>, vector<16x32xf32>
    %cst = arith.constant dense<0.000000e+00> : vector<8x32xf32>
    %2 = tpu.matmul %0, %1, %cst {dimension_numbers = #tpu.dot_dimension_numbers<[1], [0], [0], [1], [0, 0, 1, 1], [], []>} : vector<8x16xf32>, vector<16x32xf32>, vector<8x32xf32> -> vector<8x32xf32>
    %c0_3 = arith.constant 0 : index
    %c0_4 = arith.constant 0 : index
    %3 = vector.load %arg3[%c0_3, %c0_4] : memref<1x32xf32, #tpu.memory_space<vmem>>, vector<1x32xf32>
    %4 = vector.broadcast %3 : vector<1x32xf32> to vector<8x32xf32>
    %5 = arith.addf %2, %4 : vector<8x32xf32>
    %6 = math.tanh %5 : vector<8x32xf32>
    %c0_5 = arith.constant 0 : index
    %c0_6 = arith.constant 0 : index
    %7 = vector.load %arg4[%c0_5, %c0_6] : memref<32x32xf32, #tpu.memory_space<vmem>>, vector<32x32xf32>
    %cst_7 = arith.constant dense<0.000000e+00> : vector<8x32xf32>
    %8 = tpu.matmul %6, %7, %cst_7 {dimension_numbers = #tpu.dot_dimension_numbers<[1], [0], [0], [1], [0, 0, 1, 1], [], []>} : vector<8x32xf32>, vector<32x32xf32>, vector<8x32xf32> -> vector<8x32xf32>
    %c0_8 = arith.constant 0 : index
    %c0_9 = arith.constant 0 : index
    %9 = vector.load %arg5[%c0_8, %c0_9] : memref<1x32xf32, #tpu.memory_space<vmem>>, vector<1x32xf32>
    %10 = vector.broadcast %9 : vector<1x32xf32> to vector<8x32xf32>
    %11 = arith.addf %8, %10 : vector<8x32xf32>
    %12 = math.tanh %11 : vector<8x32xf32>
    %c0_10 = arith.constant 0 : index
    %c0_11 = arith.constant 0 : index
    %13 = vector.load %arg6[%c0_10, %c0_11] : memref<32x128xf32, #tpu.memory_space<vmem>>, vector<32x128xf32>
    %cst_12 = arith.constant dense<0.000000e+00> : vector<8x128xf32>
    %14 = tpu.matmul %12, %13, %cst_12 {dimension_numbers = #tpu.dot_dimension_numbers<[1], [0], [0], [1], [0, 0, 1, 1], [], []>} : vector<8x32xf32>, vector<32x128xf32>, vector<8x128xf32> -> vector<8x128xf32>
    %c0_13 = arith.constant 0 : index
    %c0_14 = arith.constant 0 : index
    %15 = vector.load %arg7[%c0_13, %c0_14] : memref<1x128xf32, #tpu.memory_space<vmem>>, vector<1x128xf32>
    %16 = vector.broadcast %15 : vector<1x128xf32> to vector<8x128xf32>
    %17 = arith.addf %14, %16 : vector<8x128xf32>
    %c0_15 = arith.constant 0 : index
    %c0_16 = arith.constant 0 : index
    %18 = vector.load %arg8[%c0_15, %c0_16] : memref<8x128xf32, #tpu.memory_space<vmem>>, vector<8x128xf32>
    tpu.vector_store %arg8[%c0_15, %c0_16], %17 {strides = array<i32>} : memref<8x128xf32, #tpu.memory_space<vmem>>, vector<8x128xf32>,
    return
  }
  func.func @transform_0(%arg0: i32) -> (i32, i32) {
    %c0_i32 = arith.constant 0 : i32
    %c0_i32_0 = arith.constant 0 : i32
    return %arg0, %c0_i32 : i32, i32
  }
  func.func @transform_1(%arg0: i32) -> (i32, i32) {
    %c0_i32 = arith.constant 0 : i32
    %c0_i32_0 = arith.constant 0 : i32
    %c0_i32_1 = arith.constant 0 : i32
    return %c0_i32, %c0_i32_0 : i32, i32
  }
  func.func @transform_2(%arg0: i32) -> (i32, i32) {
    %c0_i32 = arith.constant 0 : i32
    %c0_i32_0 = arith.constant 0 : i32
    %c0_i32_1 = arith.constant 0 : i32
    return %c0_i32, %c0_i32_0 : i32, i32
  }
  func.func @transform_3(%arg0: i32) -> (i32, i32) {
    %c0_i32 = arith.constant 0 : i32
    %c0_i32_0 = arith.constant 0 : i32
    %c0_i32_1 = arith.constant 0 : i32
    return %c0_i32, %c0_i32_0 : i32, i32
  }
  func.func @transform_4(%arg0: i32) -> (i32, i32) {
    %c0_i32 = arith.constant 0 : i32
    %c0_i32_0 = arith.constant 0 : i32
    %c0_i32_1 = arith.constant 0 : i32
    return %c0_i32, %c0_i32_0 : i32, i32
  }
  func.func @transform_5(%arg0: i32) -> (i32, i32) {
    %c0_i32 = arith.constant 0 : i32
    %c0_i32_0 = arith.constant 0 : i32
    %c0_i32_1 = arith.constant 0 : i32
    return %c0_i32, %c0_i32_0 : i32, i32
  }
  func.func @transform_6(%arg0: i32) -> (i32, i32) {
    %c0_i32 = arith.constant 0 : i32
    %c0_i32_0 = arith.constant 0 : i32
    %c0_i32_1 = arith.constant 0 : i32
    return %c0_i32, %c0_i32_0 : i32, i32
  }
  func.func @transform_7(%arg0: i32) -> (i32, i32) {
    %c0_i32 = arith.constant 0 : i32
    %c0_i32_0 = arith.constant 0 : i32
    return %arg0, %c0_i32 : i32, i32
  }
}

</mosaic_0001>

<llo_original>
// kernel: policy_forward.1
$region0: #{policy_forward.1}
  #allocation0 [shape = 'u32[]', space=smem, size = 0x4, offset = 0x4, fixed_abs, tag = 'smem constant byte address 0x4 - core index']
  #allocation1 [shape = 'u32[144,128]{1,0:T(1,128)}', space=vmem, size = 0x12000, scoped, tag = 'internal scratch']
  %s0 = inlined_call_operand.hbm [shape: f32[8,16], index: 0, kind: input, shape index: {}]
  %s1 = inlined_call_operand.hbm [shape: f32[16,32], index: 1, kind: input, shape index: {}]
  %s2 = inlined_call_operand.vmem [shape: f32[1,32], index: 2, kind: input, shape index: {}]
  %s3 = inlined_call_operand.hbm [shape: f32[32,32], index: 3, kind: input, shape index: {}]
  %s4 = inlined_call_operand.vmem [shape: f32[1,32], index: 4, kind: input, shape index: {}]
  %s5 = inlined_call_operand.hbm [shape: f32[32,128], index: 5, kind: input, shape index: {}]
  %s6 = inlined_call_operand.vmem [shape: f32[1,128], index: 6, kind: input, shape index: {}]
  %s7 = inlined_call_operand.vmem [shape: f32[8,128], index: 7, kind: output, shape index: {}]
  %s8 = sld [smem:[#allocation0]]
  $region54: #{policy_forward.1} parent=0
    _
  %s10 = ssub.s32 1, %s8
  %s11 = scalar_select 0, %s10, %s8
  $region1: #{policy_forward.1} parent=0
    #allocation2 [shape = 'u8[4096]{0}', space=vmem, size = 0x1000, scoped, tag = 'input window, operand 0, single buffered']
    #allocation3 [shape = 's32[1]{0}', space=sflag, size = 0x4, scoped, tag = 'scoped memory for policy_forward.1']
    #allocation4 [shape = 'u8[8192]{0}', space=vmem, size = 0x2000, scoped, tag = 'input window, operand 1, single buffered']
    #allocation5 [shape = 's32[1]{0}', space=sflag, size = 0x4, scoped, tag = 'scoped memory for policy_forward.1']
    #allocation6 [shape = 'u8[16384]{0}', space=vmem, size = 0x4000, scoped, tag = 'input window, operand 3, single buffered']
    #allocation7 [shape = 'u8[16384]{0}', space=vmem, size = 0x4000, scoped, tag = 'input window, operand 5, single buffered']
    #allocation8 [shape = 's32[1]{0}', space=sflag, size = 0x4, scoped, tag = 'scoped memory for policy_forward.1']
    %12 = vsyncpa [#allocation3], 0
    %13 = vsyncpa [#allocation5], 0
    %14 = vsyncpa [#allocation8], 0
    // Predicated region
    $region2: #{policy_forward.1} parent=1 // pred_check
      _
    $region3: #{policy_forward.1} parent=1 // pred_check_branch
      %16 = sbr.rel (0) target = $region5
    $region4: #{policy_forward.1} parent=1 // pred_region
      %s18 = ssub.s32 128, 128
      %19 = vsyncadd [#allocation3], %s18
      %s21 = sshll.u32 [#allocation2], 4
      %s22 = int_to_ptr.vmem [resolvable:$true] %s21
      %24 = dma.hbm_to_vmem [thread:$0]  %s0, 128, %s22, [#allocation3]
    $region5: #{policy_forward.1} parent=1 // pred_fallthru
      _
    // Predicated region
    $region6: #{policy_forward.1} parent=1 // pred_check
      _
    $region7: #{policy_forward.1} parent=1 // pred_check_branch
      %26 = sbr.rel (0) target = $region9
    $region8: #{policy_forward.1} parent=1 // pred_region
      %s28 = ssub.s32 256, 256
      %29 = vsyncadd [#allocation5], %s28
      %s30 = sshll.u32 [#allocation4], 4
      %s31 = int_to_ptr.vmem [resolvable:$true] %s30
      %36 = dma.hbm_to_vmem [thread:$0]  %s1, 256, %s31, [#allocation5], 128, 128, 8
    $region9: #{policy_forward.1} parent=1 // pred_fallthru
      _
    // Predicated region
    $region10: #{policy_forward.1} parent=1 // pred_check
      _
    $region11: #{policy_forward.1} parent=1 // pred_check_branch
      %38 = sbr.rel (0) target = $region13
    $region12: #{policy_forward.1} parent=1 // pred_region
      _
    $region13: #{policy_forward.1} parent=1 // pred_fallthru
      _
    // Predicated region
    $region14: #{policy_forward.1} parent=1 // pred_check
      _
    $region15: #{policy_forward.1} parent=1 // pred_check_branch
      %40 = sbr.rel (0) target = $region17
    $region16: #{policy_forward.1} parent=1 // pred_region
      %s42 = ssub.s32 512, 512
      %43 = vsyncadd [#allocation5], %s42
      %s44 = sshll.u32 [#allocation6], 4
      %s45 = int_to_ptr.vmem [resolvable:$true] %s44
      %50 = dma.hbm_to_vmem [thread:$0]  %s3, 512, %s45, [#allocation5], 128, 128, 8
    $region17: #{policy_forward.1} parent=1 // pred_fallthru
      _
    // Predicated region
    $region18: #{policy_forward.1} parent=1 // pred_check
      _
    $region19: #{policy_forward.1} parent=1 // pred_check_branch
      %52 = sbr.rel (0) target = $region21
    $region20: #{policy_forward.1} parent=1 // pred_region
      _
    $region21: #{policy_forward.1} parent=1 // pred_fallthru
      _
    // Predicated region
    $region22: #{policy_forward.1} parent=1 // pred_check
      _
    $region23: #{policy_forward.1} parent=1 // pred_check_branch
      %54 = sbr.rel (0) target = $region25
    $region24: #{policy_forward.1} parent=1 // pred_region
      %s56 = ssub.s32 512, 512
      %57 = vsyncadd [#allocation8], %s56
      %s58 = sshll.u32 [#allocation7], 4
      %s59 = int_to_ptr.vmem [resolvable:$true] %s58
      %64 = dma.hbm_to_vmem [thread:$0]  %s5, 512, %s59, [#allocation8], 128, 128, 8
    $region25: #{policy_forward.1} parent=1 // pred_fallthru
      _
    // Predicated region
    $region26: #{policy_forward.1} parent=1 // pred_check
      _
    $region27: #{policy_forward.1} parent=1 // pred_check_branch
      %66 = sbr.rel (0) target = $region29
    $region28: #{policy_forward.1} parent=1 // pred_region
      _
    $region29: #{policy_forward.1} parent=1 // pred_fallthru
      _
    // Predicated region
    $region30: #{policy_forward.1} parent=1 // pred_check
      _
    $region31: #{policy_forward.1} parent=1 // pred_check_branch
      %68 = sbr.rel (0) target = $region33
    $region32: #{policy_forward.1} parent=1 // pred_region
      %69 = dma.done [#allocation3], 128
    $region33: #{policy_forward.1} parent=1 // pred_fallthru
      _
    // Predicated region
    $region34: #{policy_forward.1} parent=1 // pred_check
      _
    $region35: #{policy_forward.1} parent=1 // pred_check_branch
      %71 = sbr.rel (0) target = $region37
    $region36: #{policy_forward.1} parent=1 // pred_region
      %72 = dma.done [#allocation5], 256
    $region37: #{policy_forward.1} parent=1 // pred_fallthru
      _
    // Predicated region
    $region38: #{policy_forward.1} parent=1 // pred_check
      _
    $region39: #{policy_forward.1} parent=1 // pred_check_branch
      %74 = sbr.rel (0) target = $region41
    $region40: #{policy_forward.1} parent=1 // pred_region
      %75 = dma.done [#allocation5], 512
    $region41: #{policy_forward.1} parent=1 // pred_fallthru
      _
    // Predicated region
    $region42: #{policy_forward.1} parent=1 // pred_check
      _
    $region43: #{policy_forward.1} parent=1 // pred_check_branch
      %77 = sbr.rel (0) target = $region45
    $region44: #{policy_forward.1} parent=1 // pred_region
      %78 = dma.done [#allocation8], 512
    $region45: #{policy_forward.1} parent=1 // pred_fallthru
      _
    %v79 = vld [vmem:[#allocation2] sm:$0xff]
    %v80 = vld [vmem:[#allocation4] sm:$0xff]
    %v81 = vld [vmem:[#allocation4 + $0x8] sm:$0xff]
    %v82 = vld [vmem:[%s2] sm:$0x1]
    %v84 = vlaneseq
    %v85 = vshrl.u32 %v84, 7
    %v86 = vsub.s32 0, %v85
    %v87 = vrot.slane %v82, %v86
    %vm89 = vcmask 130048
    %v91 = vsel %vm89, %v79, 0
    %93 = vmatprep.subr.mxu0 0.0
    %94 = vmatpush1.msra.mxu0 0.0
    %95 = vmatprep.subr.mxu0 0.0
    %96 = vmatpush1.msra.mxu0 0.0
    %97 = vmatprep.subr.mxu0 0.0
    %98 = vmatpush1.msra.mxu0 0.0
    %99 = vmatprep.subr.mxu0 0.0
    %100 = vmatpush1.msra.mxu0 0.0
    %101 = vmatprep.subr.mxu0 0.0
    %102 = vmatpush1.msra.mxu0 0.0
    %103 = vmatprep.subr.mxu0 0.0
    %104 = vmatpush1.msra.mxu0 0.0
    %105 = vmatprep.subr.mxu0 0.0
    %106 = vmatpush1.msra.mxu0 0.0
    %107 = vmatprep.subr.mxu0 0.0
    %108 = vmatpush1.msra.mxu0 0.0
    %109 = vmatprep.subr.mxu0 0.0
    %110 = vmatpush1.msra.mxu0 0.0
    %111 = vmatprep.subr.mxu0 0.0
    %112 = vmatpush1.msra.mxu0 0.0
    %113 = vmatprep.subr.mxu0 0.0
    %114 = vmatpush1.msra.mxu0 0.0
    %115 = vmatprep.subr.mxu0 0.0
    %116 = vmatpush1.msra.mxu0 0.0
    %117 = vmatprep.subr.mxu0 0.0
    %118 = vmatpush1.msra.mxu0 0.0
    %119 = vmatprep.subr.mxu0 0.0
    %120 = vmatpush1.msra.mxu0 0.0
    %121 = vmatprep.subr.mxu0 0.0
    %122 = vmatpush1.msra.mxu0 %v81
    %123 = vmatprep.subr.mxu0 0.0
    %124 = vmatpush1.msra.mxu0 %v80
    %125 = vmatprep.subr.mxu0 0.0
    %126 = vmatpush2.msra.mxu0 0.0
    %127 = vmatprep.subr.mxu0 0.0
    %128 = vmatpush2.msra.mxu0 0.0
    %129 = vmatprep.subr.mxu0 0.0
    %130 = vmatpush2.msra.mxu0 0.0
    %131 = vmatprep.subr.mxu0 0.0
    %132 = vmatpush2.msra.mxu0 0.0
    %133 = vmatprep.subr.mxu0 0.0
    %134 = vmatpush2.msra.mxu0 0.0
    %135 = vmatprep.subr.mxu0 0.0
    %136 = vmatpush2.msra.mxu0 0.0
    %137 = vmatprep.subr.mxu0 0.0
    %138 = vmatpush2.msra.mxu0 0.0
    %139 = vmatprep.subr.mxu0 0.0
    %140 = vmatpush2.msra.mxu0 0.0
    %141 = vmatprep.subr.mxu0 0.0
    %142 = vmatpush2.msra.mxu0 0.0
    %143 = vmatprep.subr.mxu0 0.0
    %144 = vmatpush2.msra.mxu0 0.0
    %145 = vmatprep.subr.mxu0 0.0
    %146 = vmatpush2.msra.mxu0 0.0
    %147 = vmatprep.subr.mxu0 0.0
    %148 = vmatpush2.msra.mxu0 0.0
    %149 = vmatprep.subr.mxu0 0.0
    %150 = vmatpush2.msra.mxu0 0.0
    %151 = vmatprep.subr.mxu0 0.0
    %152 = vmatpush2.msra.mxu0 0.0
    %153 = vmatprep.subr.mxu0 0.0
    %154 = vmatpush2.msra.mxu0 0.0
    %155 = vmatprep.subr.mxu0 0.0
    %156 = vmatpush2.msra.mxu0 0.0
    %157 = vmatprep.mubr.f32.mxu0 0.0
    %158 = vmatmul.mubr.f32.gmra.mxu0 %v91
    %v159 = vpop.f32.mrf.mxu0
    %v160 = vadd.f32 %v87, %v159
    %v161 = vpop.f32.mrf.mxu0
    %162 = vdwg.mxu0
    %v163 = vtanh.pop %v160
    %v164 = vld [vmem:[#allocation6] sm:$0xff]
    %v165 = vld [vmem:[#allocation6 + $0x8] sm:$0xff]
    %v166 = vld [vmem:[#allocation6 + $0x10] sm:$0xff]
    %v167 = vld [vmem:[#allocation6 + $0x18] sm:$0xff]
    %v168 = vld [vmem:[%s4] sm:$0x1]
    %v170 = vlaneseq
    %v171 = vshrl.u32 %v170, 7
    %v172 = vsub.s32 0, %v171
    %v173 = vrot.slane %v168, %v172
    %vm175 = vcmask 261120
    %v177 = vsel %vm175, %v163, 0
    %179 = vmatprep.subr.mxu0 0.0
    %180 = vmatpush1.msra.mxu0 0.0
    %181 = vmatprep.subr.mxu0 0.0
    %182 = vmatpush1.msra.mxu0 0.0
    %183 = vmatprep.subr.mxu0 0.0
    %184 = vmatpush1.msra.mxu0 0.0
    %185 = vmatprep.subr.mxu0 0.0
    %186 = vmatpush1.msra.mxu0 0.0
    %187 = vmatprep.subr.mxu0 0.0
    %188 = vmatpush1.msra.mxu0 0.0
    %189 = vmatprep.subr.mxu0 0.0
    %190 = vmatpush1.msra.mxu0 0.0
    %191 = vmatprep.subr.mxu0 0.0
    %192 = vmatpush1.msra.mxu0 0.0
    %193 = vmatprep.subr.mxu0 0.0
    %194 = vmatpush1.msra.mxu0 0.0
    %195 = vmatprep.subr.mxu0 0.0
    %196 = vmatpush1.msra.mxu0 0.0
    %197 = vmatprep.subr.mxu0 0.0
    %198 = vmatpush1.msra.mxu0 0.0
    %199 = vmatprep.subr.mxu0 0.0
    %200 = vmatpush1.msra.mxu0 0.0
    %201 = vmatprep.subr.mxu0 0.0
    %202 = vmatpush1.msra.mxu0 0.0
    %203 = vmatprep.subr.mxu0 0.0
    %204 = vmatpush1.msra.mxu0 %v167
    %205 = vmatprep.subr.mxu0 0.0
    %206 = vmatpush1.msra.mxu0 %v166
    %207 = vmatprep.subr.mxu0 0.0
    %208 = vmatpush1.msra.mxu0 %v165
    %209 = vmatprep.subr.mxu0 0.0
    %210 = vmatpush1.msra.mxu0 %v164
    %211 = vmatprep.subr.mxu0 0.0
    %212 = vmatpush2.msra.mxu0 0.0
    %213 = vmatprep.subr.mxu0 0.0
    %214 = vmatpush2.msra.mxu0 0.0
    %215 = vmatprep.subr.mxu0 0.0
    %216 = vmatpush2.msra.mxu0 0.0
    %217 = vmatprep.subr.mxu0 0.0
    %218 = vmatpush2.msra.mxu0 0.0
    %219 = vmatprep.subr.mxu0 0.0
    %220 = vmatpush2.msra.mxu0 0.0
    %221 = vmatprep.subr.mxu0 0.0
    %222 = vmatpush2.msra.mxu0 0.0
    %223 = vmatprep.subr.mxu0 0.0
    %224 = vmatpush2.msra.mxu0 0.0
    %225 = vmatprep.subr.mxu0 0.0
    %226 = vmatpush2.msra.mxu0 0.0
    %227 = vmatprep.subr.mxu0 0.0
    %228 = vmatpush2.msra.mxu0 0.0
    %229 = vmatprep.subr.mxu0 0.0
    %230 = vmatpush2.msra.mxu0 0.0
    %231 = vmatprep.subr.mxu0 0.0
    %232 = vmatpush2.msra.mxu0 0.0
    %233 = vmatprep.subr.mxu0 0.0
    %234 = vmatpush2.msra.mxu0 0.0
    %235 = vmatprep.subr.mxu0 0.0
    %236 = vmatpush2.msra.mxu0 0.0
    %237 = vmatprep.subr.mxu0 0.0
    %238 = vmatpush2.msra.mxu0 0.0
    %239 = vmatprep.subr.mxu0 0.0
    %240 = vmatpush2.msra.mxu0 0.0
    %241 = vmatprep.subr.mxu0 0.0
    %242 = vmatpush2.msra.mxu0 0.0
    %243 = vmatprep.mubr.f32.mxu0 0.0
    %244 = vmatmul.mubr.f32.gmra.mxu0 %v177
    %v245 = vpop.f32.mrf.mxu0
    %v246 = vadd.f32 %v173, %v245
    %v247 = vpop.f32.mrf.mxu0
    %248 = vdwg.mxu0
    %v249 = vtanh.pop %v246
    %v250 = vld [vmem:[#allocation7] sm:$0xff]
    %v251 = vld [vmem:[#allocation7 + $0x8] sm:$0xff]
    %v252 = vld [vmem:[#allocation7 + $0x10] sm:$0xff]
    %v253 = vld [vmem:[#allocation7 + $0x18] sm:$0xff]
    %v254 = vld [vmem:[%s6] sm:$0x1]
    %v256 = vlaneseq
    %v257 = vshrl.u32 %v256, 7
    %v258 = vsub.s32 0, %v257
    %v259 = vrot.slane %v254, %v258
    %v262 = vsel %vm175, %v249, 0
    %264 = vmatprep.subr.mxu0 0.0
    %265 = vmatpush1.msra.mxu0 0.0
    %266 = vmatprep.subr.mxu0 0.0
    %267 = vmatpush1.msra.mxu0 0.0
    %268 = vmatprep.subr.mxu0 0.0
    %269 = vmatpush1.msra.mxu0 0.0
    %270 = vmatprep.subr.mxu0 0.0
    %271 = vmatpush1.msra.mxu0 0.0
    %272 = vmatprep.subr.mxu0 0.0
    %273 = vmatpush1.msra.mxu0 0.0
    %274 = vmatprep.subr.mxu0 0.0
    %275 = vmatpush1.msra.mxu0 0.0
    %276 = vmatprep.subr.mxu0 0.0
    %277 = vmatpush1.msra.mxu0 0.0
    %278 = vmatprep.subr.mxu0 0.0
    %279 = vmatpush1.msra.mxu0 0.0
    %280 = vmatprep.subr.mxu0 0.0
    %281 = vmatpush1.msra.mxu0 0.0
    %282 = vmatprep.subr.mxu0 0.0
    %283 = vmatpush1.msra.mxu0 0.0
    %284 = vmatprep.subr.mxu0 0.0
    %285 = vmatpush1.msra.mxu0 0.0
    %286 = vmatprep.subr.mxu0 0.0
    %287 = vmatpush1.msra.mxu0 0.0
    %288 = vmatprep.subr.mxu0 0.0
    %289 = vmatpush1.msra.mxu0 %v253
    %290 = vmatprep.subr.mxu0 0.0
    %291 = vmatpush1.msra.mxu0 %v252
    %292 = vmatprep.subr.mxu0 0.0
    %293 = vmatpush1.msra.mxu0 %v251
    %294 = vmatprep.subr.mxu0 0.0
    %295 = vmatpush1.msra.mxu0 %v250
    %296 = vmatprep.subr.mxu0 0.0
    %297 = vmatpush2.msra.mxu0 0.0
    %298 = vmatprep.subr.mxu0 0.0
    %299 = vmatpush2.msra.mxu0 0.0
    %300 = vmatprep.subr.mxu0 0.0
    %301 = vmatpush2.msra.mxu0 0.0
    %302 = vmatprep.subr.mxu0 0.0
    %303 = vmatpush2.msra.mxu0 0.0
    %304 = vmatprep.subr.mxu0 0.0
    %305 = vmatpush2.msra.mxu0 0.0
    %306 = vmatprep.subr.mxu0 0.0
    %307 = vmatpush2.msra.mxu0 0.0
    %308 = vmatprep.subr.mxu0 0.0
    %309 = vmatpush2.msra.mxu0 0.0
    %310 = vmatprep.subr.mxu0 0.0
    %311 = vmatpush2.msra.mxu0 0.0
    %312 = vmatprep.subr.mxu0 0.0
    %313 = vmatpush2.msra.mxu0 0.0
    %314 = vmatprep.subr.mxu0 0.0
    %315 = vmatpush2.msra.mxu0 0.0
    %316 = vmatprep.subr.mxu0 0.0
    %317 = vmatpush2.msra.mxu0 0.0
    %318 = vmatprep.subr.mxu0 0.0
    %319 = vmatpush2.msra.mxu0 0.0
    %320 = vmatprep.subr.mxu0 0.0
    %321 = vmatpush2.msra.mxu0 0.0
    %322 = vmatprep.subr.mxu0 0.0
    %323 = vmatpush2.msra.mxu0 0.0
    %324 = vmatprep.subr.mxu0 0.0
    %325 = vmatpush2.msra.mxu0 0.0
    %326 = vmatprep.subr.mxu0 0.0
    %327 = vmatpush2.msra.mxu0 0.0
    %328 = vmatprep.mubr.f32.mxu0 0.0
    %329 = vmatmul.mubr.f32.gmra.mxu0 %v262
    %v330 = vpop.f32.mrf.mxu0
    %v331 = vadd.f32 %v259, %v330
    %v332 = vpop.f32.mrf.mxu0
    %333 = vdwg.mxu0
    %334 = vst [vmem:[%s7] sm:$0xff] %v331
    // Predicated region
    $region46: #{policy_forward.1} parent=1 // pred_check
      _
    $region47: #{policy_forward.1} parent=1 // pred_check_branch
      %336 = sbr.rel (0) target = $region49
    $region48: #{policy_forward.1} parent=1 // pred_region
      _
    $region49: #{policy_forward.1} parent=1 // pred_fallthru
      _
    // Predicated region
    $region50: #{policy_forward.1} parent=1 // pred_check
      _
    $region51: #{policy_forward.1} parent=1 // pred_check_branch
      %338 = sbr.rel (0) target = $region53
    $region52: #{policy_forward.1} parent=1 // pred_region
      _
    $region53: #{policy_forward.1} parent=1 // pred_fallthru
      _
    %339 = vsyncpa [#allocation3], 1
    %340 = vsyncpa [#allocation5], 1
    %341 = vsyncpa [#allocation8], 1

</llo_original>
